<compile_context>
chip_gen: v6e
topology: v6e:2x2x1
jax: 0.10.0
libtpu: 0.0.40
codegen_flags: <defaults>
</compile_context>

<pallas_src>
import jax
import jax.numpy as jnp
from jax.experimental import pallas as pl
from jax.experimental.pallas import tpu as pltpu

SUBLANE_BF16 = 16          # bf16 rows per packed sublane group
SINGLE_TILE_MAX = 64       # batches up to this run as one grid step
MAX_BATCH_TILE = 1024      # cap on rows per grid step for huge batches


def _round_up(x, m):
    return (x + m - 1) // m * m


def dqn_mlp_kernel(x_ref, w1_ref, b1_ref, w2_ref, b2_ref, w3_ref, b3_ref, o_ref):
    # In-kernel bf16 cast of the f32 input tile (no extra wrapper pass over x).
    x = x_ref[...].astype(jnp.bfloat16)
    # Layer 1: Linear (bf16 MXU, f32 accumulate) + bias + ReLU in f32.
    h1 = jnp.dot(x, w1_ref[...], preferred_element_type=jnp.float32)
    h1 = jnp.maximum(h1 + b1_ref[...], 0.0)
    # Layer 2.
    h2 = jnp.dot(h1.astype(jnp.bfloat16), w2_ref[...],
                 preferred_element_type=jnp.float32)
    h2 = jnp.maximum(h2 + b2_ref[...], 0.0)
    # Layer 3: Q-values (no activation), stored at the real (narrow) width.
    q = jnp.dot(h2.astype(jnp.bfloat16), w3_ref[...],
                preferred_element_type=jnp.float32)
    o_ref[...] = q + b3_ref[...]


def prepare_params(w1, b1, w2, b2, w3, b3):
    """One-time cast of weights to bf16 (MXU operands) and biases to f32.

    Hoisted out of the forward so a DQN loop does not re-cast every call.
    """
    return (w1.astype(jnp.bfloat16), b1.astype(jnp.float32),
            w2.astype(jnp.bfloat16), b2.astype(jnp.float32),
            w3.astype(jnp.bfloat16), b3.astype(jnp.float32))


def dqn_forward(x, w1, b1, w2, b2, w3, b3):
    """Fused DQN MLP forward.  Expects params from prepare_params()."""
    B, state_dim = x.shape
    hidden_dim = w1.shape[1]
    action_dim = w3.shape[1]

    # --- Batch tiling --------------------------------------------------------
    # Tiny batches: a single grid step, rounded to 16 rows (bf16 packing).
    # Larger batches: at least 2 grid steps (v7x has 2 TensorCores and the
    # grid axis is "parallel"), capped at MAX_BATCH_TILE rows per step.
    if B <= SINGLE_TILE_MAX:
        batch_tile = _round_up(B, SUBLANE_BF16)
    else:
        batch_tile = min(MAX_BATCH_TILE,
                         _round_up(pl.cdiv(B, 2), SUBLANE_BF16))
    grid = (pl.cdiv(B, batch_tile),)   # ragged last block handled by Pallas

    out = pl.pallas_call(
        dqn_mlp_kernel,
        out_shape=jax.ShapeDtypeStruct((B, action_dim), jnp.float32),
        grid_spec=pltpu.PrefetchScalarGridSpec(
            num_scalar_prefetch=0,
            grid=grid,
            in_specs=[
                pl.BlockSpec((batch_tile, state_dim), lambda i: (i, 0)),   # x tile (f32)
                pl.BlockSpec((state_dim, hidden_dim), lambda i: (0, 0)),   # w1 (resident)
                pl.BlockSpec((1, hidden_dim), lambda i: (0, 0)),           # b1
                pl.BlockSpec((hidden_dim, hidden_dim), lambda i: (0, 0)),  # w2
                pl.BlockSpec((1, hidden_dim), lambda i: (0, 0)),           # b2
                pl.BlockSpec((hidden_dim, action_dim), lambda i: (0, 0)),  # w3 (narrow)
                pl.BlockSpec((1, action_dim), lambda i: (0, 0)),           # b3
            ],
            out_specs=pl.BlockSpec((batch_tile, action_dim), lambda i: (i, 0)),
        ),
        compiler_params=pltpu.CompilerParams(
            dimension_semantics=("parallel",),
        ),
    )(x, w1, b1, w2, b2, w3, b3)

    return out


def init_params(key, state_dim, hidden_dim, action_dim):
    """Deterministic synthetic parameters (PyTorch-style uniform fan-in init)."""
    ks = jax.random.split(key, 6)

    def lin(kw, kb, fan_in, fan_out):
        bound = 1.0 / jnp.sqrt(fan_in)
        w = jax.random.uniform(kw, (fan_in, fan_out), jnp.float32, -bound, bound)
        b = jax.random.uniform(kb, (1, fan_out), jnp.float32, -bound, bound)
        return w, b

    w1, b1 = lin(ks[0], ks[1], state_dim, hidden_dim)
    w2, b2 = lin(ks[2], ks[3], hidden_dim, hidden_dim)
    w3, b3 = lin(ks[4], ks[5], hidden_dim, action_dim)
    return w1, b1, w2, b2, w3, b3


def _reference(x, w1, b1, w2, b2, w3, b3):
    # Same bf16-matmul / f32-accumulate scheme as the kernel.
    h = jnp.dot(x.astype(jnp.bfloat16), w1.astype(jnp.bfloat16),
                preferred_element_type=jnp.float32) + b1
    h = jnp.maximum(h, 0.0)
    h = jnp.dot(h.astype(jnp.bfloat16), w2.astype(jnp.bfloat16),
                preferred_element_type=jnp.float32) + b2
    h = jnp.maximum(h, 0.0)
    return jnp.dot(h.astype(jnp.bfloat16), w3.astype(jnp.bfloat16),
                   preferred_element_type=jnp.float32) + b3


if __name__ == "__main__":
    # Shapes consistent with DQNNetwork(state_dim, action_dim, hidden_dim=128).
    state_dim, hidden_dim, action_dim = 16, 128, 8

    key = jax.random.PRNGKey(0)
    k_x, k_p = jax.random.split(key)
    raw_params = init_params(k_p, state_dim, hidden_dim, action_dim)
    params = prepare_params(*raw_params)   # bf16 weights cached once

    fwd = jax.jit(dqn_forward)

    # B=8: single tile; B=10: ragged single tile (OOB rows masked on store);
    # B=96: two grid steps (exercises the multi-tile / megacore path).
    for B in (8, 10, 96):
        xb = jax.random.normal(jax.random.fold_in(k_x, B), (B, state_dim),
                               jnp.float32)
        q = fwd(xb, *params)
        jax.block_until_ready(q)
        assert q.shape == (B, action_dim)
        ref = _reference(xb, *raw_params)
        assert jnp.allclose(q, ref, atol=2e-2, rtol=2e-2), \
            f"mismatch at B={B}: {jnp.max(jnp.abs(q - ref))}"

    print("KERNEL_OK")
</pallas_src>

<mosaic_0001>
module attributes {stable_mosaic.version = 11 : i64} {
  func.func @dqn_mlp_kernel(%arg0: i32, %arg1: memref<16x16xf32, #tpu.memory_space<vmem>>, %arg2: memref<16x128xbf16, #tpu.memory_space<vmem>>, %arg3: memref<1x128xf32, #tpu.memory_space<vmem>>, %arg4: memref<128x128xbf16, #tpu.memory_space<vmem>>, %arg5: memref<1x128xf32, #tpu.memory_space<vmem>>, %arg6: memref<128x8xbf16, #tpu.memory_space<vmem>>, %arg7: memref<1x8xf32, #tpu.memory_space<vmem>>, %arg8: memref<16x8xf32, #tpu.memory_space<vmem>>) attributes {dimension_semantics = [#tpu.dimension_semantics<parallel>], iteration_bounds = array<i64: 1>, scalar_prefetch = 0 : i64, scratch_operands = 0 : i64, tpu.core_type = #tpu.core_type<tc>, window_params = [{transform_indices = @transform_0, window_bounds = array<i64: 16, 16>}, {pipeline_mode = #tpu.pipeline_mode<synchronous>, transform_indices = @transform_1, window_bounds = array<i64: 16, 128>}, {pipeline_mode = #tpu.pipeline_mode<synchronous>, transform_indices = @transform_2, window_bounds = array<i64: 1, 128>}, {pipeline_mode = #tpu.pipeline_mode<synchronous>, transform_indices = @transform_3, window_bounds = array<i64: 128, 128>}, {pipeline_mode = #tpu.pipeline_mode<synchronous>, transform_indices = @transform_4, window_bounds = array<i64: 1, 128>}, {pipeline_mode = #tpu.pipeline_mode<synchronous>, transform_indices = @transform_5, window_bounds = array<i64: 128, 8>}, {pipeline_mode = #tpu.pipeline_mode<synchronous>, transform_indices = @transform_6, window_bounds = array<i64: 1, 8>}, {transform_indices = @transform_7, window_bounds = array<i64: 16, 8>}]} {
    %c0 = arith.constant 0 : index
    %c0_0 = arith.constant 0 : index
    %0 = vector.load %arg1[%c0, %c0_0] : memref<16x16xf32, #tpu.memory_space<vmem>>, vector<16x16xf32>
    %1 = arith.truncf %0 : vector<16x16xf32> to vector<16x16xbf16>
    %c0_1 = arith.constant 0 : index
    %c0_2 = arith.constant 0 : index
    %2 = vector.load %arg2[%c0_1, %c0_2] : memref<16x128xbf16, #tpu.memory_space<vmem>>, vector<16x128xbf16>
    %cst = arith.constant dense<0.000000e+00> : vector<16x128xf32>
    %3 = tpu.matmul %1, %2, %cst {dimension_numbers = #tpu.dot_dimension_numbers<[1], [0], [0], [1], [0, 0, 1, 1], [], []>} : vector<16x16xbf16>, vector<16x128xbf16>, vector<16x128xf32> -> vector<16x128xf32>
    %c0_3 = arith.constant 0 : index
    %c0_4 = arith.constant 0 : index
    %4 = vector.load %arg3[%c0_3, %c0_4] : memref<1x128xf32, #tpu.memory_space<vmem>>, vector<1x128xf32>
    %5 = vector.broadcast %4 : vector<1x128xf32> to vector<16x128xf32>
    %6 = arith.addf %3, %5 : vector<16x128xf32>
    %cst_5 = arith.constant 0.000000e+00 : f32
    %7 = vector.broadcast %cst_5 : f32 to vector<16x128xf32>
    %8 = arith.maximumf %6, %7 : vector<16x128xf32>
    %9 = arith.truncf %8 : vector<16x128xf32> to vector<16x128xbf16>
    %c0_6 = arith.constant 0 : index
    %c0_7 = arith.constant 0 : index
    %10 = vector.load %arg4[%c0_6, %c0_7] : memref<128x128xbf16, #tpu.memory_space<vmem>>, vector<128x128xbf16>
    %cst_8 = arith.constant dense<0.000000e+00> : vector<16x128xf32>
    %11 = tpu.matmul %9, %10, %cst_8 {dimension_numbers = #tpu.dot_dimension_numbers<[1], [0], [0], [1], [0, 0, 1, 1], [], []>} : vector<16x128xbf16>, vector<128x128xbf16>, vector<16x128xf32> -> vector<16x128xf32>
    %c0_9 = arith.constant 0 : index
    %c0_10 = arith.constant 0 : index
    %12 = vector.load %arg5[%c0_9, %c0_10] : memref<1x128xf32, #tpu.memory_space<vmem>>, vector<1x128xf32>
    %13 = vector.broadcast %12 : vector<1x128xf32> to vector<16x128xf32>
    %14 = arith.addf %11, %13 : vector<16x128xf32>
    %cst_11 = arith.constant 0.000000e+00 : f32
    %15 = vector.broadcast %cst_11 : f32 to vector<16x128xf32>
    %16 = arith.maximumf %14, %15 : vector<16x128xf32>
    %17 = arith.truncf %16 : vector<16x128xf32> to vector<16x128xbf16>
    %c0_12 = arith.constant 0 : index
    %c0_13 = arith.constant 0 : index
    %18 = vector.load %arg6[%c0_12, %c0_13] : memref<128x8xbf16, #tpu.memory_space<vmem>>, vector<128x8xbf16>
    %cst_14 = arith.constant dense<0.000000e+00> : vector<16x8xf32>
    %19 = tpu.matmul %17, %18, %cst_14 {dimension_numbers = #tpu.dot_dimension_numbers<[1], [0], [0], [1], [0, 0, 1, 1], [], []>} : vector<16x128xbf16>, vector<128x8xbf16>, vector<16x8xf32> -> vector<16x8xf32>
    %c0_15 = arith.constant 0 : index
    %c0_16 = arith.constant 0 : index
    %20 = vector.load %arg7[%c0_15, %c0_16] : memref<1x8xf32, #tpu.memory_space<vmem>>, vector<1x8xf32>
    %21 = vector.broadcast %20 : vector<1x8xf32> to vector<16x8xf32>
    %22 = arith.addf %19, %21 : vector<16x8xf32>
    %c0_17 = arith.constant 0 : index
    %c0_18 = arith.constant 0 : index
    %23 = vector.load %arg8[%c0_17, %c0_18] : memref<16x8xf32, #tpu.memory_space<vmem>>, vector<16x8xf32>
    tpu.vector_store %arg8[%c0_17, %c0_18], %22 {strides = array<i32>} : memref<16x8xf32, #tpu.memory_space<vmem>>, vector<16x8xf32>,
    return
  }
  func.func @transform_0(%arg0: i32) -> (i32, i32) {
    %c0_i32 = arith.constant 0 : i32
    %c0_i32_0 = arith.constant 0 : i32
    return %arg0, %c0_i32 : i32, i32
  }
  func.func @transform_1(%arg0: i32) -> (i32, i32) {
    %c0_i32 = arith.constant 0 : i32
    %c0_i32_0 = arith.constant 0 : i32
    %c0_i32_1 = arith.constant 0 : i32
    return %c0_i32, %c0_i32_0 : i32, i32
  }
  func.func @transform_2(%arg0: i32) -> (i32, i32) {
    %c0_i32 = arith.constant 0 : i32
    %c0_i32_0 = arith.constant 0 : i32
    %c0_i32_1 = arith.constant 0 : i32
    return %c0_i32, %c0_i32_0 : i32, i32
  }
  func.func @transform_3(%arg0: i32) -> (i32, i32) {
    %c0_i32 = arith.constant 0 : i32
    %c0_i32_0 = arith.constant 0 : i32
    %c0_i32_1 = arith.constant 0 : i32
    return %c0_i32, %c0_i32_0 : i32, i32
  }
  func.func @transform_4(%arg0: i32) -> (i32, i32) {
    %c0_i32 = arith.constant 0 : i32
    %c0_i32_0 = arith.constant 0 : i32
    %c0_i32_1 = arith.constant 0 : i32
    return %c0_i32, %c0_i32_0 : i32, i32
  }
  func.func @transform_5(%arg0: i32) -> (i32, i32) {
    %c0_i32 = arith.constant 0 : i32
    %c0_i32_0 = arith.constant 0 : i32
    %c0_i32_1 = arith.constant 0 : i32
    return %c0_i32, %c0_i32_0 : i32, i32
  }
  func.func @transform_6(%arg0: i32) -> (i32, i32) {
    %c0_i32 = arith.constant 0 : i32
    %c0_i32_0 = arith.constant 0 : i32
    %c0_i32_1 = arith.constant 0 : i32
    return %c0_i32, %c0_i32_0 : i32, i32
  }
  func.func @transform_7(%arg0: i32) -> (i32, i32) {
    %c0_i32 = arith.constant 0 : i32
    %c0_i32_0 = arith.constant 0 : i32
    return %arg0, %c0_i32 : i32, i32
  }
}

</mosaic_0001>

<llo_original>
// kernel: dqn_forward.1
$region0: #{dqn_forward.1}
  #allocation0 [shape = 'u32[]', space=smem, size = 0x4, offset = 0x4, fixed_abs, tag = 'smem constant byte address 0x4 - core index']
  #allocation1 [shape = 'u32[144,128]{1,0:T(1,128)}', space=vmem, size = 0x12000, scoped, tag = 'internal scratch']
  %s0 = inlined_call_operand.vmem [shape: f32[8,16], index: 0, kind: input, shape index: {}]
  %s1 = inlined_call_operand.hbm [shape: bf16[16,128], index: 1, kind: input, shape index: {}]
  %s2 = inlined_call_operand.vmem [shape: f32[1,128], index: 2, kind: input, shape index: {}]
  %s3 = inlined_call_operand.vmem [shape: bf16[128,128], index: 3, kind: input, shape index: {}]
  %s4 = inlined_call_operand.hbm [shape: f32[1,128], index: 4, kind: input, shape index: {}]
  %s5 = inlined_call_operand.vmem [shape: bf16[128,8], index: 5, kind: input, shape index: {}]
  %s6 = inlined_call_operand.vmem [shape: f32[1,8], index: 6, kind: input, shape index: {}]
  %s7 = inlined_call_operand.hbm [shape: f32[8,8], index: 7, kind: output, shape index: {}]
  %s8 = sld [smem:[#allocation0]]
  $region46: #{dqn_forward.1} parent=0
    _
  %s10 = ssub.s32 1, %s8
  %s11 = scalar_select 0, %s10, %s8
  $region1: #{dqn_forward.1} parent=0
    #allocation2 [shape = 'u8[4096]{0}', space=vmem, size = 0x1000, scoped, tag = 'input window, operand 1, single buffered']
    #allocation3 [shape = 's32[1]{0}', space=sflag, size = 0x4, scoped, tag = 'scoped memory for dqn_forward.1']
    #allocation4 [shape = 's32[1]{0}', space=sflag, size = 0x4, scoped, tag = 'scoped memory for dqn_forward.1']
    #allocation5 [shape = 'u8[512]{0}', space=vmem, size = 0x400, scoped, tag = 'input window, operand 4, single buffered']
    #allocation6 [shape = 's32[1]{0}', space=sflag, size = 0x4, scoped, tag = 'scoped memory for dqn_forward.1']
    #allocation7 [shape = 'u8[8192]{0}', space=vmem, size = 0x2000, scoped, tag = 'output window, operand 0, single buffered']
    %12 = vsyncpa [#allocation3], 0
    %13 = vsyncpa [#allocation6], 0
    %14 = vsyncpa [#allocation4], 0
    // Predicated region
    $region2: #{dqn_forward.1} parent=1 // pred_check
      _
    $region3: #{dqn_forward.1} parent=1 // pred_check_branch
      %16 = sbr.rel (0) target = $region5
    $region4: #{dqn_forward.1} parent=1 // pred_region
      _
    $region5: #{dqn_forward.1} parent=1 // pred_fallthru
      _
    // Predicated region
    $region6: #{dqn_forward.1} parent=1 // pred_check
      _
    $region7: #{dqn_forward.1} parent=1 // pred_check_branch
      %18 = sbr.rel (0) target = $region9
    $region8: #{dqn_forward.1} parent=1 // pred_region
      %s20 = ssub.s32 128, 128
      %21 = vsyncadd [#allocation3], %s20
      %s22 = sshll.u32 [#allocation2], 4
      %s23 = int_to_ptr.vmem [resolvable:$true] %s22
      %28 = dma.hbm_to_vmem [thread:$0]  %s1, 128, %s23, [#allocation3], 64, 64, 4
    $region9: #{dqn_forward.1} parent=1 // pred_fallthru
      _
    // Predicated region
    $region10: #{dqn_forward.1} parent=1 // pred_check
      _
    $region11: #{dqn_forward.1} parent=1 // pred_check_branch
      %30 = sbr.rel (0) target = $region13
    $region12: #{dqn_forward.1} parent=1 // pred_region
      _
    $region13: #{dqn_forward.1} parent=1 // pred_fallthru
      _
    // Predicated region
    $region14: #{dqn_forward.1} parent=1 // pred_check
      _
    $region15: #{dqn_forward.1} parent=1 // pred_check_branch
      %32 = sbr.rel (0) target = $region17
    $region16: #{dqn_forward.1} parent=1 // pred_region
      _
    $region17: #{dqn_forward.1} parent=1 // pred_fallthru
      _
    // Predicated region
    $region18: #{dqn_forward.1} parent=1 // pred_check
      _
    $region19: #{dqn_forward.1} parent=1 // pred_check_branch
      %34 = sbr.rel (0) target = $region21
    $region20: #{dqn_forward.1} parent=1 // pred_region
      %s36 = ssub.s32 16, 16
      %37 = vsyncadd [#allocation6], %s36
      %s39 = sshll.u32 [#allocation5], 4
      %s40 = int_to_ptr.vmem [resolvable:$true] %s39
      %42 = dma.hbm_to_vmem [thread:$0]  %s4, 16, %s40, [#allocation6]
    $region21: #{dqn_forward.1} parent=1 // pred_fallthru
      _
    // Predicated region
    $region22: #{dqn_forward.1} parent=1 // pred_check
      _
    $region23: #{dqn_forward.1} parent=1 // pred_check_branch
      %44 = sbr.rel (0) target = $region25
    $region24: #{dqn_forward.1} parent=1 // pred_region
      _
    $region25: #{dqn_forward.1} parent=1 // pred_fallthru
      _
    // Predicated region
    $region26: #{dqn_forward.1} parent=1 // pred_check
      _
    $region27: #{dqn_forward.1} parent=1 // pred_check_branch
      %46 = sbr.rel (0) target = $region29
    $region28: #{dqn_forward.1} parent=1 // pred_region
      _
    $region29: #{dqn_forward.1} parent=1 // pred_fallthru
      _
    // Predicated region
    $region30: #{dqn_forward.1} parent=1 // pred_check
      _
    $region31: #{dqn_forward.1} parent=1 // pred_check_branch
      %48 = sbr.rel (0) target = $region33
    $region32: #{dqn_forward.1} parent=1 // pred_region
      %49 = dma.done [#allocation3], 128
    $region33: #{dqn_forward.1} parent=1 // pred_fallthru
      _
    // Predicated region
    $region34: #{dqn_forward.1} parent=1 // pred_check
      _
    $region35: #{dqn_forward.1} parent=1 // pred_check_branch
      %51 = sbr.rel (0) target = $region37
    $region36: #{dqn_forward.1} parent=1 // pred_region
      %52 = dma.done [#allocation6], 16
    $region37: #{dqn_forward.1} parent=1 // pred_fallthru
      _
    %v54 = vld [vmem:[%s0] sm:$0xff]
    %v55 = vld [vmem:[%s0 + $0x8] sm:$0xff]
    %v56 = vpack.c.bf16 %v55, %v54
    %v57 = vld [vmem:[#allocation2] sm:$0xf]
    %v58 = vld [vmem:[#allocation2 + $0x4] sm:$0xf]
    %v59 = vld [vmem:[%s2] sm:$0x1]
    %v61 = vlaneseq
    %v62 = vshrl.u32 %v61, 7
    %v63 = vsub.s32 0, %v62
    %v64 = vrot.slane %v59, %v63
    %v68 = vunpack.c.l.b16 %v57
    %v69 = vunpack.c.l.b16 %v58
    %v70 = vpack.c.b16 %v69, %v68
    %vm72 = vcmask 130048
    %v74 = vsel %vm72, %v56, 0
    %76 = vmatprep.subr.bf16.mxu0 0
    %77 = vmatpush1.bf16.msra.mxu0 0
    %78 = vmatprep.subr.bf16.mxu0 0
    %79 = vmatpush1.bf16.msra.mxu0 0
    %80 = vmatprep.subr.bf16.mxu0 0
    %81 = vmatpush1.bf16.msra.mxu0 0
    %82 = vmatprep.subr.bf16.mxu0 0
    %83 = vmatpush1.bf16.msra.mxu0 0
    %84 = vmatprep.subr.bf16.mxu0 0
    %85 = vmatpush1.bf16.msra.mxu0 0
    %86 = vmatprep.subr.bf16.mxu0 0
    %87 = vmatpush1.bf16.msra.mxu0 0
    %88 = vmatprep.subr.bf16.mxu0 0
    %89 = vmatpush1.bf16.msra.mxu0 0
    %90 = vmatprep.subr.bf16.mxu0 0
    %91 = vmatpush1.bf16.msra.mxu0 %v70
    %92 = vmatprep.subr.bf16.mxu0 0
    %93 = vmatpush2.bf16.msra.mxu0 0
    %94 = vmatprep.subr.bf16.mxu0 0
    %95 = vmatpush2.bf16.msra.mxu0 0
    %96 = vmatprep.subr.bf16.mxu0 0
    %97 = vmatpush2.bf16.msra.mxu0 0
    %98 = vmatprep.subr.bf16.mxu0 0
    %99 = vmatpush2.bf16.msra.mxu0 0
    %100 = vmatprep.subr.bf16.mxu0 0
    %101 = vmatpush2.bf16.msra.mxu0 0
    %102 = vmatprep.subr.bf16.mxu0 0
    %103 = vmatpush2.bf16.msra.mxu0 0
    %104 = vmatprep.subr.bf16.mxu0 0
    %105 = vmatpush2.bf16.msra.mxu0 0
    %106 = vmatprep.subr.bf16.mxu0 0
    %107 = vmatpush2.bf16.msra.mxu0 0
    %108 = vmatprep.mubr.bf16.mxu0 0
    %109 = vmatmul.mubr.bf16.gmra.mxu0 %v74
    %v110 = vpop.f32.mrf.mxu0
    %v111 = vadd.f32 %v64, %v110
    %v112 = vpop.f32.mrf.mxu0
    %v113 = vpop.f32.mrf.mxu0
    %v114 = vadd.f32 %v64, %v113
    %v115 = vpop.f32.mrf.mxu0
    %116 = vdwg.mxu0
    %v117 = vmax.f32 %v111, 0.0
    %v118 = vmax.f32 %v114, 0.0
    %v119 = vpack.c.bf16 %v118, %v117
    %v120 = vld [vmem:[%s3] sm:$0xf]
    %v121 = vld [vmem:[%s3 + $0x4] sm:$0xf]
    %v122 = vld [vmem:[%s3 + $0x8] sm:$0xf]
    %v123 = vld [vmem:[%s3 + $0xc] sm:$0xf]
    %v124 = vld [vmem:[%s3 + $0x10] sm:$0xf]
    %v125 = vld [vmem:[%s3 + $0x14] sm:$0xf]
    %v126 = vld [vmem:[%s3 + $0x18] sm:$0xf]
    %v127 = vld [vmem:[%s3 + $0x1c] sm:$0xf]
    %v128 = vld [vmem:[%s3 + $0x20] sm:$0xf]
    %v129 = vld [vmem:[%s3 + $0x24] sm:$0xf]
    %v130 = vld [vmem:[%s3 + $0x28] sm:$0xf]
    %v131 = vld [vmem:[%s3 + $0x2c] sm:$0xf]
    %v132 = vld [vmem:[%s3 + $0x30] sm:$0xf]
    %v133 = vld [vmem:[%s3 + $0x34] sm:$0xf]
    %v134 = vld [vmem:[%s3 + $0x38] sm:$0xf]
    %v135 = vld [vmem:[%s3 + $0x3c] sm:$0xf]
    %v136 = vld [vmem:[#allocation5] sm:$0x1]
    %v138 = vlaneseq
    %v139 = vshrl.u32 %v138, 7
    %v140 = vsub.s32 0, %v139
    %v141 = vrot.slane %v136, %v140
    %v159 = vunpack.c.l.b16 %v120
    %v160 = vunpack.c.l.b16 %v121
    %v161 = vunpack.c.l.b16 %v122
    %v162 = vunpack.c.l.b16 %v123
    %v163 = vunpack.c.l.b16 %v124
    %v164 = vunpack.c.l.b16 %v125
    %v165 = vunpack.c.l.b16 %v126
    %v166 = vunpack.c.l.b16 %v127
    %v167 = vunpack.c.l.b16 %v128
    %v168 = vunpack.c.l.b16 %v129
    %v169 = vunpack.c.l.b16 %v130
    %v170 = vunpack.c.l.b16 %v131
    %v171 = vunpack.c.l.b16 %v132
    %v172 = vunpack.c.l.b16 %v133
    %v173 = vunpack.c.l.b16 %v134
    %v174 = vunpack.c.l.b16 %v135
    %v175 = vpack.c.b16 %v160, %v159
    %v176 = vpack.c.b16 %v162, %v161
    %v177 = vpack.c.b16 %v164, %v163
    %v178 = vpack.c.b16 %v166, %v165
    %v179 = vpack.c.b16 %v168, %v167
    %v180 = vpack.c.b16 %v170, %v169
    %v181 = vpack.c.b16 %v172, %v171
    %v182 = vpack.c.b16 %v174, %v173
    %191 = vmatprep.subr.bf16.mxu0 0
    %192 = vmatpush1.bf16.msra.mxu0 %v182
    %193 = vmatprep.subr.bf16.mxu0 0
    %194 = vmatpush1.bf16.msra.mxu0 %v181
    %195 = vmatprep.subr.bf16.mxu0 0
    %196 = vmatpush1.bf16.msra.mxu0 %v180
    %197 = vmatprep.subr.bf16.mxu0 0
    %198 = vmatpush1.bf16.msra.mxu0 %v179
    %199 = vmatprep.subr.bf16.mxu0 0
    %200 = vmatpush1.bf16.msra.mxu0 %v178
    %201 = vmatprep.subr.bf16.mxu0 0
    %202 = vmatpush1.bf16.msra.mxu0 %v177
    %203 = vmatprep.subr.bf16.mxu0 0
    %204 = vmatpush1.bf16.msra.mxu0 %v176
    %205 = vmatprep.subr.bf16.mxu0 0
    %206 = vmatpush1.bf16.msra.mxu0 %v175
    %207 = vmatprep.subr.bf16.mxu0 0
    %208 = vmatpush2.bf16.msra.mxu0 0
    %209 = vmatprep.subr.bf16.mxu0 0
    %210 = vmatpush2.bf16.msra.mxu0 0
    %211 = vmatprep.subr.bf16.mxu0 0
    %212 = vmatpush2.bf16.msra.mxu0 0
    %213 = vmatprep.subr.bf16.mxu0 0
    %214 = vmatpush2.bf16.msra.mxu0 0
    %215 = vmatprep.subr.bf16.mxu0 0
    %216 = vmatpush2.bf16.msra.mxu0 0
    %217 = vmatprep.subr.bf16.mxu0 0
    %218 = vmatpush2.bf16.msra.mxu0 0
    %219 = vmatprep.subr.bf16.mxu0 0
    %220 = vmatpush2.bf16.msra.mxu0 0
    %221 = vmatprep.subr.bf16.mxu0 0
    %222 = vmatpush2.bf16.msra.mxu0 0
    %223 = vmatprep.mubr.bf16.mxu0 0
    %224 = vmatmul.mubr.bf16.gmra.mxu0 %v119
    %v225 = vpop.f32.mrf.mxu0
    %v226 = vadd.f32 %v141, %v225
    %v227 = vpop.f32.mrf.mxu0
    %v228 = vpop.f32.mrf.mxu0
    %v229 = vadd.f32 %v141, %v228
    %v230 = vpop.f32.mrf.mxu0
    %231 = vdwg.mxu0
    %v232 = vmax.f32 %v226, 0.0
    %v233 = vmax.f32 %v229, 0.0
    %v234 = vpack.c.bf16 %v233, %v232
    %v235 = vld [vmem:[%s5] sm:$0xf]
    %v236 = vld [vmem:[%s5 + $0x4] sm:$0xf]
    %v237 = vld [vmem:[%s5 + $0x8] sm:$0xf]
    %v238 = vld [vmem:[%s5 + $0xc] sm:$0xf]
    %v239 = vld [vmem:[%s5 + $0x10] sm:$0xf]
    %v240 = vld [vmem:[%s5 + $0x14] sm:$0xf]
    %v241 = vld [vmem:[%s5 + $0x18] sm:$0xf]
    %v242 = vld [vmem:[%s5 + $0x1c] sm:$0xf]
    %v243 = vld [vmem:[%s5 + $0x20] sm:$0xf]
    %v244 = vld [vmem:[%s5 + $0x24] sm:$0xf]
    %v245 = vld [vmem:[%s5 + $0x28] sm:$0xf]
    %v246 = vld [vmem:[%s5 + $0x2c] sm:$0xf]
    %v247 = vld [vmem:[%s5 + $0x30] sm:$0xf]
    %v248 = vld [vmem:[%s5 + $0x34] sm:$0xf]
    %v249 = vld [vmem:[%s5 + $0x38] sm:$0xf]
    %v250 = vld [vmem:[%s5 + $0x3c] sm:$0xf]
    %v251 = vld [vmem:[%s6] sm:$0x1]
    %v253 = vlaneseq
    %v254 = vshrl.u32 %v253, 7
    %v255 = vsub.s32 0, %v254
    %v256 = vrot.slane %v251, %v255
    %v274 = vunpack.c.l.b16 %v235
    %v275 = vunpack.c.l.b16 %v236
    %v276 = vunpack.c.l.b16 %v237
    %v277 = vunpack.c.l.b16 %v238
    %v278 = vunpack.c.l.b16 %v239
    %v279 = vunpack.c.l.b16 %v240
    %v280 = vunpack.c.l.b16 %v241
    %v281 = vunpack.c.l.b16 %v242
    %v282 = vunpack.c.l.b16 %v243
    %v283 = vunpack.c.l.b16 %v244
    %v284 = vunpack.c.l.b16 %v245
    %v285 = vunpack.c.l.b16 %v246
    %v286 = vunpack.c.l.b16 %v247
    %v287 = vunpack.c.l.b16 %v248
    %v288 = vunpack.c.l.b16 %v249
    %v289 = vunpack.c.l.b16 %v250
    %v290 = vpack.c.b16 %v275, %v274
    %v291 = vpack.c.b16 %v277, %v276
    %v292 = vpack.c.b16 %v279, %v278
    %v293 = vpack.c.b16 %v281, %v280
    %v294 = vpack.c.b16 %v283, %v282
    %v295 = vpack.c.b16 %v285, %v284
    %v296 = vpack.c.b16 %v287, %v286
    %v297 = vpack.c.b16 %v289, %v288
    %306 = vmatprep.subr.bf16.mxu0 0
    %307 = vmatpush1.bf16.msra.mxu0 %v297
    %308 = vmatprep.subr.bf16.mxu0 0
    %309 = vmatpush1.bf16.msra.mxu0 %v296
    %310 = vmatprep.subr.bf16.mxu0 0
    %311 = vmatpush1.bf16.msra.mxu0 %v295
    %312 = vmatprep.subr.bf16.mxu0 0
    %313 = vmatpush1.bf16.msra.mxu0 %v294
    %314 = vmatprep.subr.bf16.mxu0 0
    %315 = vmatpush1.bf16.msra.mxu0 %v293
    %316 = vmatprep.subr.bf16.mxu0 0
    %317 = vmatpush1.bf16.msra.mxu0 %v292
    %318 = vmatprep.subr.bf16.mxu0 0
    %319 = vmatpush1.bf16.msra.mxu0 %v291
    %320 = vmatprep.subr.bf16.mxu0 0
    %321 = vmatpush1.bf16.msra.mxu0 %v290
    %322 = vmatprep.subr.bf16.mxu0 0
    %323 = vmatpush2.bf16.msra.mxu0 0
    %324 = vmatprep.subr.bf16.mxu0 0
    %325 = vmatpush2.bf16.msra.mxu0 0
    %326 = vmatprep.subr.bf16.mxu0 0
    %327 = vmatpush2.bf16.msra.mxu0 0
    %328 = vmatprep.subr.bf16.mxu0 0
    %329 = vmatpush2.bf16.msra.mxu0 0
    %330 = vmatprep.subr.bf16.mxu0 0
    %331 = vmatpush2.bf16.msra.mxu0 0
    %332 = vmatprep.subr.bf16.mxu0 0
    %333 = vmatpush2.bf16.msra.mxu0 0
    %334 = vmatprep.subr.bf16.mxu0 0
    %335 = vmatpush2.bf16.msra.mxu0 0
    %336 = vmatprep.subr.bf16.mxu0 0
    %337 = vmatpush2.bf16.msra.mxu0 0
    %338 = vmatprep.mubr.bf16.mxu0 0
    %339 = vmatmul.mubr.bf16.gmra.mxu0 %v234
    %v340 = vpop.f32.mrf.mxu0
    %v341 = vadd.f32 %v256, %v340
    %v342 = vpop.f32.mrf.mxu0
    %v343 = vpop.f32.mrf.mxu0
    %v344 = vadd.f32 %v256, %v343
    %v345 = vpop.f32.mrf.mxu0
    %346 = vdwg.mxu0
    %vm347 = vcmask 64512
    %348 = vst.msk [vmem:[#allocation7] sm:$0xff] %vm347, %v341
    %349 = vst.msk [vmem:[#allocation7 + $0x8] sm:$0xff] %vm347, %v344
    // Predicated region
    $region38: #{dqn_forward.1} parent=1 // pred_check
      _
    $region39: #{dqn_forward.1} parent=1 // pred_check_branch
      %351 = sbr.rel (0) target = $region41
    $region40: #{dqn_forward.1} parent=1 // pred_region
      %s353 = ssub.s32 256, 128
      %354 = vsyncadd [#allocation4], %s353
      %s355 = sshll.u32 [#allocation7], 4
      %s356 = int_to_ptr.vmem [resolvable:$true] %s355
      %361 = dma.vmem_to_hbm [thread:$0]  %s356, 128, %s7, [#allocation4], 128, 128, 8
    $region41: #{dqn_forward.1} parent=1 // pred_fallthru
      _
    // Predicated region
    $region42: #{dqn_forward.1} parent=1 // pred_check
      _
    $region43: #{dqn_forward.1} parent=1 // pred_check_branch
      %363 = sbr.rel (0) target = $region45
    $region44: #{dqn_forward.1} parent=1 // pred_region
      %364 = dma.done [#allocation4], 256
    $region45: #{dqn_forward.1} parent=1 // pred_fallthru
      _
    %365 = vsyncpa [#allocation3], 1
    %366 = vsyncpa [#allocation6], 1
    %367 = vsyncpa [#allocation4], 1

</llo_original>
